<compile_context>
chip_gen: v5e
topology: v5e:2x2
jax: 0.10.0
libtpu: 0.0.40
codegen_flags: <defaults>
</compile_context>

<pallas_src>
import functools

import jax
import jax.numpy as jnp
from jax import lax
from jax.experimental import pallas as pl
from jax.experimental.pallas import tpu as pltpu

_ROWS_PER_TILE_MAX = 256           # output rows per grid step (multiple of 8)
_H_BLOCK_BUDGET = 16 * 1024 * 1024   # bytes per resident-h buffer
_OUT_BLOCK_BUDGET = 2 * 1024 * 1024  # bytes per output tile buffer


def _unpool_gather_kernel(inv_ref, h_ref, out_ref, *, rows_per_tile, unroll):
    # inv_ref: (n_pad,) int32 scalar-prefetch ref in SMEM. inv[row] = source row
    #          in h, or -1 for rows that must stay zero (incl. grid padding).
    # h_ref:   (M, Dc) VMEM block of h, resident across the row-tile grid axis.
    # out_ref: (R, Dc) VMEM output tile; written exactly once per grid step.
    row_tile = pl.program_id(1)
    base = row_tile * rows_per_tile

    def copy_row(r, carry):
        src = inv_ref[base + r]                   # cheap SMEM scalar read
        valid = src >= 0
        safe_src = jnp.maximum(src, 0)            # clamp: -1 -> 0 (masked below)
        row = h_ref[pl.ds(safe_src, 1), :]        # dynamic row load from VMEM
        out_ref[pl.ds(r, 1), :] = jnp.where(valid, row, jnp.zeros_like(row))
        return carry

    lax.fori_loop(0, rows_per_tile, copy_row, 0, unroll=unroll)


@functools.partial(jax.jit, static_argnames=("n", "d_block"))
def _scatter_rows(idx, h, *, n, d_block=None):
    """Returns new_h of shape (n, h.shape[1]) with new_h[idx] = h, zeros elsewhere."""
    m, d = h.shape
    itemsize = h.dtype.itemsize

    # --- tile geometry ------------------------------------------------------
    # Output row tile: full n (legal for any n) or 256 (multiple of 8).
    rows_per_tile = n if n <= _ROWS_PER_TILE_MAX else _ROWS_PER_TILE_MAX
    n_tiles = pl.cdiv(n, rows_per_tile)
    n_pad = n_tiles * rows_per_tile               # inv is padded to this length

    # Feature-dim chunking so (resident h block) and (output tile) fit VMEM.
    if d_block is not None:
        d_chunk_cap = d_block                     # test/override hook (mult. of 128)
    else:
        dc_h = (_H_BLOCK_BUDGET // max(m * itemsize, 1)) // 128 * 128
        dc_o = (_OUT_BLOCK_BUDGET // max(rows_per_tile * itemsize, 1)) // 128 * 128
        d_chunk_cap = max(128, min(dc_h, dc_o))
    if d <= d_chunk_cap:
        d_chunk, d_tiles = d, 1
    else:
        d_chunk, d_tiles = d_chunk_cap, pl.cdiv(d, d_chunk_cap)
    # TODO(synk): if m * d_chunk * itemsize still exceeds VMEM (very large M),
    # stream h row-tiles (per-row DMA gather from HBM) instead of residency.

    # Inverse index: inv[out_row] = source row in h, -1 => zero row.
    # (Out-of-range idx entries are dropped by the XLA scatter -> no OOB risk.)
    inv = jnp.full((n_pad,), -1, dtype=jnp.int32)
    inv = inv.at[idx.astype(jnp.int32)].set(jnp.arange(m, dtype=jnp.int32))

    # VMEM budget: 2x (double-buffered) resident h chunk + 2x output tile.
    vmem_need = 2 * (m * d_chunk + rows_per_tile * d_chunk) * itemsize
    vmem_limit = int(min(max(vmem_need + (8 << 20), 16 << 20), 48 << 20))

    unroll = 8 if rows_per_tile % 8 == 0 else True

    kernel = functools.partial(
        _unpool_gather_kernel, rows_per_tile=rows_per_tile, unroll=unroll)

    out = pl.pallas_call(
        kernel,
        out_shape=jax.ShapeDtypeStruct((n, d), h.dtype),
        grid_spec=pltpu.PrefetchScalarGridSpec(
            num_scalar_prefetch=1,                 # inv -> SMEM
            # Feature chunks outermost so each h chunk is DMA'd to VMEM once
            # and stays resident across all output row tiles.
            grid=(d_tiles, n_tiles),
            in_specs=[
                pl.BlockSpec((m, d_chunk), lambda j, i, inv_ref: (0, j)),
            ],
            out_specs=pl.BlockSpec((rows_per_tile, d_chunk),
                                   lambda j, i, inv_ref: (i, j)),
        ),
        compiler_params=pltpu.CompilerParams(
            # Gather form: every output block is written exactly once, so both
            # axes are safely parallel (2x on v7x's two TensorCores).
            dimension_semantics=("parallel", "parallel"),
            vmem_limit_bytes=vmem_limit,
        ),
        cost_estimate=pl.CostEstimate(
            flops=0, transcendentals=0,
            bytes_accessed=(m * d + n * d) * itemsize),
    )(inv, h)
    return out


def unpool(g, h, pre_h, idx):
    """Pallas implementation of Unpool.forward(g, h, pre_h, idx)."""
    del pre_h  # unused by the reference module's forward
    new_h = _scatter_rows(idx, h, n=g.shape[0])
    return g, new_h


def _reference(n, h, idx):
    return jnp.zeros((n, h.shape[1]), dtype=h.dtype).at[idx].set(h)


if __name__ == "__main__":
    key = jax.random.PRNGKey(0)
    k_g, k_h, k_pre, k_idx, k2, k3 = jax.random.split(key, 6)

    # --- main example (shapes implied by the module) -------------------------
    N, M, D = 12, 8, 32
    g = jax.random.normal(k_g, (N, N), dtype=jnp.float32)        # pass-through
    h = jax.random.normal(k_h, (M, D), dtype=jnp.float32)        # pooled features
    pre_h = jax.random.normal(k_pre, (N, D), dtype=jnp.float32)  # unused
    idx = jax.random.permutation(k_idx, N)[:M].astype(jnp.int32)

    g_out, new_h = unpool(g, h, pre_h, idx)
    jax.block_until_ready(new_h)

    assert g_out.shape == g.shape and jnp.allclose(g_out, g)
    assert new_h.shape == (N, D) and new_h.dtype == h.dtype
    assert jnp.allclose(new_h, _reference(N, h, idx), atol=0.0)

    # --- multi row-tile path (n > 256, non-divisible boundary tile) ----------
    N2, M2, D2 = 600, 250, 40
    k2a, k2b = jax.random.split(k2)
    h2 = jax.random.normal(k2a, (M2, D2), dtype=jnp.float32)
    idx2 = jax.random.permutation(k2b, N2)[:M2].astype(jnp.int32)
    out2 = _scatter_rows(idx2, h2, n=N2)
    jax.block_until_ready(out2)
    assert jnp.allclose(out2, _reference(N2, h2, idx2), atol=0.0)

    # --- feature-chunked path (forced 128-wide chunks, ragged last chunk) ----
    N3, M3, D3 = 40, 16, 300
    k3a, k3b = jax.random.split(k3)
    h3 = jax.random.normal(k3a, (M3, D3), dtype=jnp.float32)
    idx3 = jax.random.permutation(k3b, N3)[:M3].astype(jnp.int32)
    out3 = _scatter_rows(idx3, h3, n=N3, d_block=128)
    jax.block_until_ready(out3)
    assert jnp.allclose(out3, _reference(N3, h3, idx3), atol=0.0)

    print("KERNEL_OK")
</pallas_src>

<mosaic_0001>
module attributes {stable_mosaic.version = 11 : i64} {
  func.func @_unpool_gather_kernel(%arg0: i32, %arg1: i32, %arg2: memref<12xi32, #tpu.memory_space<smem>>, %arg3: memref<8x32xf32, #tpu.memory_space<vmem>>, %arg4: memref<12x32xf32, #tpu.memory_space<vmem>>) attributes {dimension_semantics = [#tpu.dimension_semantics<parallel>, #tpu.dimension_semantics<parallel>], iteration_bounds = array<i64: 1, 1>, scalar_prefetch = 1 : i64, scratch_operands = 0 : i64, tpu.core_type = #tpu.core_type<tc>, window_params = [{transform_indices = @transform_0, window_bounds = array<i64: 8, 32>}, {transform_indices = @transform_1, window_bounds = array<i64: 12, 32>}]} {
    %c12_i32 = arith.constant 12 : i32
    %0 = arith.muli %arg1, %c12_i32 : i32
    %c0_i32 = arith.constant 0 : i32
    %1 = arith.addi %0, %c0_i32 : i32
    %2 = arith.index_cast %1 : i32 to index
    %3 = memref.load %arg2[%2] : memref<12xi32, #tpu.memory_space<smem>>
    %c0_i32_0 = arith.constant 0 : i32
    %4 = arith.cmpi sge, %3, %c0_i32_0 : i32
    %c0_i32_1 = arith.constant 0 : i32
    %5 = arith.maxsi %3, %c0_i32_1 : i32
    %6 = arith.index_cast %5 : i32 to index
    %c0 = arith.constant 0 : index
    %7 = vector.load %arg3[%6, %c0] : memref<8x32xf32, #tpu.memory_space<vmem>>, vector<1x32xf32>
    %cst = arith.constant 0.000000e+00 : f32
    %8 = vector.broadcast %cst : f32 to vector<1x32xf32>
    %9 = arith.select %4, %7, %8 : vector<1x32xf32>
    %10 = arith.index_cast %c0_i32 : i32 to index
    %c0_2 = arith.constant 0 : index
    %11 = vector.load %arg4[%10, %c0_2] : memref<12x32xf32, #tpu.memory_space<vmem>>, vector<1x32xf32>
    tpu.vector_store %arg4[%10, %c0_2], %9 {strides = array<i32>} : memref<12x32xf32, #tpu.memory_space<vmem>>, vector<1x32xf32>,
    %c1_i32 = arith.constant 1 : i32
    %12 = arith.addi %0, %c1_i32 : i32
    %13 = arith.index_cast %12 : i32 to index
    %14 = memref.load %arg2[%13] : memref<12xi32, #tpu.memory_space<smem>>
    %c0_i32_3 = arith.constant 0 : i32
    %15 = arith.cmpi sge, %14, %c0_i32_3 : i32
    %c0_i32_4 = arith.constant 0 : i32
    %16 = arith.maxsi %14, %c0_i32_4 : i32
    %17 = arith.index_cast %16 : i32 to index
    %c0_5 = arith.constant 0 : index
    %18 = vector.load %arg3[%17, %c0_5] : memref<8x32xf32, #tpu.memory_space<vmem>>, vector<1x32xf32>
    %cst_6 = arith.constant 0.000000e+00 : f32
    %19 = vector.broadcast %cst_6 : f32 to vector<1x32xf32>
    %20 = arith.select %15, %18, %19 : vector<1x32xf32>
    %21 = arith.index_cast %c1_i32 : i32 to index
    %c0_7 = arith.constant 0 : index
    %22 = vector.load %arg4[%21, %c0_7] : memref<12x32xf32, #tpu.memory_space<vmem>>, vector<1x32xf32>
    tpu.vector_store %arg4[%21, %c0_7], %20 {strides = array<i32>} : memref<12x32xf32, #tpu.memory_space<vmem>>, vector<1x32xf32>,
    %c2_i32 = arith.constant 2 : i32
    %23 = arith.addi %0, %c2_i32 : i32
    %24 = arith.index_cast %23 : i32 to index
    %25 = memref.load %arg2[%24] : memref<12xi32, #tpu.memory_space<smem>>
    %c0_i32_8 = arith.constant 0 : i32
    %26 = arith.cmpi sge, %25, %c0_i32_8 : i32
    %c0_i32_9 = arith.constant 0 : i32
    %27 = arith.maxsi %25, %c0_i32_9 : i32
    %28 = arith.index_cast %27 : i32 to index
    %c0_10 = arith.constant 0 : index
    %29 = vector.load %arg3[%28, %c0_10] : memref<8x32xf32, #tpu.memory_space<vmem>>, vector<1x32xf32>
    %cst_11 = arith.constant 0.000000e+00 : f32
    %30 = vector.broadcast %cst_11 : f32 to vector<1x32xf32>
    %31 = arith.select %26, %29, %30 : vector<1x32xf32>
    %32 = arith.index_cast %c2_i32 : i32 to index
    %c0_12 = arith.constant 0 : index
    %33 = vector.load %arg4[%32, %c0_12] : memref<12x32xf32, #tpu.memory_space<vmem>>, vector<1x32xf32>
    tpu.vector_store %arg4[%32, %c0_12], %31 {strides = array<i32>} : memref<12x32xf32, #tpu.memory_space<vmem>>, vector<1x32xf32>,
    %c3_i32 = arith.constant 3 : i32
    %34 = arith.addi %0, %c3_i32 : i32
    %35 = arith.index_cast %34 : i32 to index
    %36 = memref.load %arg2[%35] : memref<12xi32, #tpu.memory_space<smem>>
    %c0_i32_13 = arith.constant 0 : i32
    %37 = arith.cmpi sge, %36, %c0_i32_13 : i32
    %c0_i32_14 = arith.constant 0 : i32
    %38 = arith.maxsi %36, %c0_i32_14 : i32
    %39 = arith.index_cast %38 : i32 to index
    %c0_15 = arith.constant 0 : index
    %40 = vector.load %arg3[%39, %c0_15] : memref<8x32xf32, #tpu.memory_space<vmem>>, vector<1x32xf32>
    %cst_16 = arith.constant 0.000000e+00 : f32
    %41 = vector.broadcast %cst_16 : f32 to vector<1x32xf32>
    %42 = arith.select %37, %40, %41 : vector<1x32xf32>
    %43 = arith.index_cast %c3_i32 : i32 to index
    %c0_17 = arith.constant 0 : index
    %44 = vector.load %arg4[%43, %c0_17] : memref<12x32xf32, #tpu.memory_space<vmem>>, vector<1x32xf32>
    tpu.vector_store %arg4[%43, %c0_17], %42 {strides = array<i32>} : memref<12x32xf32, #tpu.memory_space<vmem>>, vector<1x32xf32>,
    %c4_i32 = arith.constant 4 : i32
    %45 = arith.addi %0, %c4_i32 : i32
    %46 = arith.index_cast %45 : i32 to index
    %47 = memref.load %arg2[%46] : memref<12xi32, #tpu.memory_space<smem>>
    %c0_i32_18 = arith.constant 0 : i32
    %48 = arith.cmpi sge, %47, %c0_i32_18 : i32
    %c0_i32_19 = arith.constant 0 : i32
    %49 = arith.maxsi %47, %c0_i32_19 : i32
    %50 = arith.index_cast %49 : i32 to index
    %c0_20 = arith.constant 0 : index
    %51 = vector.load %arg3[%50, %c0_20] : memref<8x32xf32, #tpu.memory_space<vmem>>, vector<1x32xf32>
    %cst_21 = arith.constant 0.000000e+00 : f32
    %52 = vector.broadcast %cst_21 : f32 to vector<1x32xf32>
    %53 = arith.select %48, %51, %52 : vector<1x32xf32>
    %54 = arith.index_cast %c4_i32 : i32 to index
    %c0_22 = arith.constant 0 : index
    %55 = vector.load %arg4[%54, %c0_22] : memref<12x32xf32, #tpu.memory_space<vmem>>, vector<1x32xf32>
    tpu.vector_store %arg4[%54, %c0_22], %53 {strides = array<i32>} : memref<12x32xf32, #tpu.memory_space<vmem>>, vector<1x32xf32>,
    %c5_i32 = arith.constant 5 : i32
    %56 = arith.addi %0, %c5_i32 : i32
    %57 = arith.index_cast %56 : i32 to index
    %58 = memref.load %arg2[%57] : memref<12xi32, #tpu.memory_space<smem>>
    %c0_i32_23 = arith.constant 0 : i32
    %59 = arith.cmpi sge, %58, %c0_i32_23 : i32
    %c0_i32_24 = arith.constant 0 : i32
    %60 = arith.maxsi %58, %c0_i32_24 : i32
    %61 = arith.index_cast %60 : i32 to index
    %c0_25 = arith.constant 0 : index
    %62 = vector.load %arg3[%61, %c0_25] : memref<8x32xf32, #tpu.memory_space<vmem>>, vector<1x32xf32>
    %cst_26 = arith.constant 0.000000e+00 : f32
    %63 = vector.broadcast %cst_26 : f32 to vector<1x32xf32>
    %64 = arith.select %59, %62, %63 : vector<1x32xf32>
    %65 = arith.index_cast %c5_i32 : i32 to index
    %c0_27 = arith.constant 0 : index
    %66 = vector.load %arg4[%65, %c0_27] : memref<12x32xf32, #tpu.memory_space<vmem>>, vector<1x32xf32>
    tpu.vector_store %arg4[%65, %c0_27], %64 {strides = array<i32>} : memref<12x32xf32, #tpu.memory_space<vmem>>, vector<1x32xf32>,
    %c6_i32 = arith.constant 6 : i32
    %67 = arith.addi %0, %c6_i32 : i32
    %68 = arith.index_cast %67 : i32 to index
    %69 = memref.load %arg2[%68] : memref<12xi32, #tpu.memory_space<smem>>
    %c0_i32_28 = arith.constant 0 : i32
    %70 = arith.cmpi sge, %69, %c0_i32_28 : i32
    %c0_i32_29 = arith.constant 0 : i32
    %71 = arith.maxsi %69, %c0_i32_29 : i32
    %72 = arith.index_cast %71 : i32 to index
    %c0_30 = arith.constant 0 : index
    %73 = vector.load %arg3[%72, %c0_30] : memref<8x32xf32, #tpu.memory_space<vmem>>, vector<1x32xf32>
    %cst_31 = arith.constant 0.000000e+00 : f32
    %74 = vector.broadcast %cst_31 : f32 to vector<1x32xf32>
    %75 = arith.select %70, %73, %74 : vector<1x32xf32>
    %76 = arith.index_cast %c6_i32 : i32 to index
    %c0_32 = arith.constant 0 : index
    %77 = vector.load %arg4[%76, %c0_32] : memref<12x32xf32, #tpu.memory_space<vmem>>, vector<1x32xf32>
    tpu.vector_store %arg4[%76, %c0_32], %75 {strides = array<i32>} : memref<12x32xf32, #tpu.memory_space<vmem>>, vector<1x32xf32>,
    %c7_i32 = arith.constant 7 : i32
    %78 = arith.addi %0, %c7_i32 : i32
    %79 = arith.index_cast %78 : i32 to index
    %80 = memref.load %arg2[%79] : memref<12xi32, #tpu.memory_space<smem>>
    %c0_i32_33 = arith.constant 0 : i32
    %81 = arith.cmpi sge, %80, %c0_i32_33 : i32
    %c0_i32_34 = arith.constant 0 : i32
    %82 = arith.maxsi %80, %c0_i32_34 : i32
    %83 = arith.index_cast %82 : i32 to index
    %c0_35 = arith.constant 0 : index
    %84 = vector.load %arg3[%83, %c0_35] : memref<8x32xf32, #tpu.memory_space<vmem>>, vector<1x32xf32>
    %cst_36 = arith.constant 0.000000e+00 : f32
    %85 = vector.broadcast %cst_36 : f32 to vector<1x32xf32>
    %86 = arith.select %81, %84, %85 : vector<1x32xf32>
    %87 = arith.index_cast %c7_i32 : i32 to index
    %c0_37 = arith.constant 0 : index
    %88 = vector.load %arg4[%87, %c0_37] : memref<12x32xf32, #tpu.memory_space<vmem>>, vector<1x32xf32>
    tpu.vector_store %arg4[%87, %c0_37], %86 {strides = array<i32>} : memref<12x32xf32, #tpu.memory_space<vmem>>, vector<1x32xf32>,
    %c8_i32 = arith.constant 8 : i32
    %89 = arith.addi %0, %c8_i32 : i32
    %90 = arith.index_cast %89 : i32 to index
    %91 = memref.load %arg2[%90] : memref<12xi32, #tpu.memory_space<smem>>
    %c0_i32_38 = arith.constant 0 : i32
    %92 = arith.cmpi sge, %91, %c0_i32_38 : i32
    %c0_i32_39 = arith.constant 0 : i32
    %93 = arith.maxsi %91, %c0_i32_39 : i32
    %94 = arith.index_cast %93 : i32 to index
    %c0_40 = arith.constant 0 : index
    %95 = vector.load %arg3[%94, %c0_40] : memref<8x32xf32, #tpu.memory_space<vmem>>, vector<1x32xf32>
    %cst_41 = arith.constant 0.000000e+00 : f32
    %96 = vector.broadcast %cst_41 : f32 to vector<1x32xf32>
    %97 = arith.select %92, %95, %96 : vector<1x32xf32>
    %98 = arith.index_cast %c8_i32 : i32 to index
    %c0_42 = arith.constant 0 : index
    %99 = vector.load %arg4[%98, %c0_42] : memref<12x32xf32, #tpu.memory_space<vmem>>, vector<1x32xf32>
    tpu.vector_store %arg4[%98, %c0_42], %97 {strides = array<i32>} : memref<12x32xf32, #tpu.memory_space<vmem>>, vector<1x32xf32>,
    %c9_i32 = arith.constant 9 : i32
    %100 = arith.addi %0, %c9_i32 : i32
    %101 = arith.index_cast %100 : i32 to index
    %102 = memref.load %arg2[%101] : memref<12xi32, #tpu.memory_space<smem>>
    %c0_i32_43 = arith.constant 0 : i32
    %103 = arith.cmpi sge, %102, %c0_i32_43 : i32
    %c0_i32_44 = arith.constant 0 : i32
    %104 = arith.maxsi %102, %c0_i32_44 : i32
    %105 = arith.index_cast %104 : i32 to index
    %c0_45 = arith.constant 0 : index
    %106 = vector.load %arg3[%105, %c0_45] : memref<8x32xf32, #tpu.memory_space<vmem>>, vector<1x32xf32>
    %cst_46 = arith.constant 0.000000e+00 : f32
    %107 = vector.broadcast %cst_46 : f32 to vector<1x32xf32>
    %108 = arith.select %103, %106, %107 : vector<1x32xf32>
    %109 = arith.index_cast %c9_i32 : i32 to index
    %c0_47 = arith.constant 0 : index
    %110 = vector.load %arg4[%109, %c0_47] : memref<12x32xf32, #tpu.memory_space<vmem>>, vector<1x32xf32>
    tpu.vector_store %arg4[%109, %c0_47], %108 {strides = array<i32>} : memref<12x32xf32, #tpu.memory_space<vmem>>, vector<1x32xf32>,
    %c10_i32 = arith.constant 10 : i32
    %111 = arith.addi %0, %c10_i32 : i32
    %112 = arith.index_cast %111 : i32 to index
    %113 = memref.load %arg2[%112] : memref<12xi32, #tpu.memory_space<smem>>
    %c0_i32_48 = arith.constant 0 : i32
    %114 = arith.cmpi sge, %113, %c0_i32_48 : i32
    %c0_i32_49 = arith.constant 0 : i32
    %115 = arith.maxsi %113, %c0_i32_49 : i32
    %116 = arith.index_cast %115 : i32 to index
    %c0_50 = arith.constant 0 : index
    %117 = vector.load %arg3[%116, %c0_50] : memref<8x32xf32, #tpu.memory_space<vmem>>, vector<1x32xf32>
    %cst_51 = arith.constant 0.000000e+00 : f32
    %118 = vector.broadcast %cst_51 : f32 to vector<1x32xf32>
    %119 = arith.select %114, %117, %118 : vector<1x32xf32>
    %120 = arith.index_cast %c10_i32 : i32 to index
    %c0_52 = arith.constant 0 : index
    %121 = vector.load %arg4[%120, %c0_52] : memref<12x32xf32, #tpu.memory_space<vmem>>, vector<1x32xf32>
    tpu.vector_store %arg4[%120, %c0_52], %119 {strides = array<i32>} : memref<12x32xf32, #tpu.memory_space<vmem>>, vector<1x32xf32>,
    %c11_i32 = arith.constant 11 : i32
    %122 = arith.addi %0, %c11_i32 : i32
    %123 = arith.index_cast %122 : i32 to index
    %124 = memref.load %arg2[%123] : memref<12xi32, #tpu.memory_space<smem>>
    %c0_i32_53 = arith.constant 0 : i32
    %125 = arith.cmpi sge, %124, %c0_i32_53 : i32
    %c0_i32_54 = arith.constant 0 : i32
    %126 = arith.maxsi %124, %c0_i32_54 : i32
    %127 = arith.index_cast %126 : i32 to index
    %c0_55 = arith.constant 0 : index
    %128 = vector.load %arg3[%127, %c0_55] : memref<8x32xf32, #tpu.memory_space<vmem>>, vector<1x32xf32>
    %cst_56 = arith.constant 0.000000e+00 : f32
    %129 = vector.broadcast %cst_56 : f32 to vector<1x32xf32>
    %130 = arith.select %125, %128, %129 : vector<1x32xf32>
    %131 = arith.index_cast %c11_i32 : i32 to index
    %c0_57 = arith.constant 0 : index
    %132 = vector.load %arg4[%131, %c0_57] : memref<12x32xf32, #tpu.memory_space<vmem>>, vector<1x32xf32>
    tpu.vector_store %arg4[%131, %c0_57], %130 {strides = array<i32>} : memref<12x32xf32, #tpu.memory_space<vmem>>, vector<1x32xf32>,
    %c12_i32_58 = arith.constant 12 : i32
    return
  }
  func.func @transform_0(%arg0: i32, %arg1: i32, %arg2: memref<12xi32, #tpu.memory_space<smem>>) -> (i32, i32) {
    %c0_i32 = arith.constant 0 : i32
    %c0_i32_0 = arith.constant 0 : i32
    return %c0_i32, %arg0 : i32, i32
  }
  func.func @transform_1(%arg0: i32, %arg1: i32, %arg2: memref<12xi32, #tpu.memory_space<smem>>) -> (i32, i32) {
    %c0_i32 = arith.constant 0 : i32
    return %arg1, %arg0 : i32, i32
  }
}

</mosaic_0001>

<llo_original>
// kernel: _scatter_rows.1
$region0: #{_scatter_rows.1}
  #allocation0 [shape = 'u32[]', space=smem, size = 0x4, offset = 0x4, fixed_abs, tag = 'smem constant byte address 0x4 - core index']
  #allocation1 [shape = 'u32[72,128]{1,0:T(1,128)}', space=vmem, size = 0x9000, scoped, tag = 'internal scratch']
  #allocation2 [shape = 's32[1]{0}', space=sflag, size = 0x4, scoped, tag = 'scoped memory for _scatter_rows.1']
  #allocation3 [shape = 'u8[512]{0}', space=smem, size = 0x200, scoped, tag = 'prefetched SMEM operand 0']
  %s0 = inlined_call_operand.vmem [shape: s32[12], index: 0, kind: input, shape index: {}]
  %s1 = inlined_call_operand.hbm [shape: f32[8,32], index: 1, kind: input, shape index: {}]
  %s2 = inlined_call_operand.hbm [shape: f32[12,32], index: 2, kind: output, shape index: {}]
  %s3 = sld [smem:[#allocation0]]
  $region18: #{_scatter_rows.1} parent=0
    _
  %s5 = ssub.s32 1, %s3
  %s6 = scalar_select 0, %s5, %s3
  %s8 = sshll.u32 %s0, 4
  %s9 = int_to_ptr.vmem [resolvable:$true] %s8
  %11 = dma.vmem_to_smem %s9, 16, [#allocation3], [#allocation2]
  %13 = dma.done [#allocation2], 16
  %14 = sfence
  $region1: #{_scatter_rows.1} parent=0
    #allocation4 [shape = 'u8[4096]{0}', space=vmem, size = 0x1000, scoped, tag = 'input window, operand 1, single buffered']
    #allocation5 [shape = 's32[1]{0}', space=sflag, size = 0x4, scoped, tag = 'scoped memory for _scatter_rows.1']
    #allocation6 [shape = 's32[1]{0}', space=sflag, size = 0x4, scoped, tag = 'scoped memory for _scatter_rows.1']
    #allocation7 [shape = 'u8[8192]{0}', space=vmem, size = 0x2000, scoped, tag = 'output window, operand 0, single buffered']
    %15 = vsyncpa [#allocation5], 0
    %16 = vsyncpa [#allocation6], 0
    // Predicated region
    $region2: #{_scatter_rows.1} parent=1 // pred_check
      _
    $region3: #{_scatter_rows.1} parent=1 // pred_check_branch
      %18 = sbr.rel (0) target = $region5
    $region4: #{_scatter_rows.1} parent=1 // pred_region
      %20 = vsyncadd [#allocation5], 0
      %s22 = sshll.u32 %s1, 4
      %s23 = int_to_ptr.hbm [resolvable:$true] %s22
      %s24 = sshll.u32 [#allocation4], 4
      %s25 = int_to_ptr.vmem [resolvable:$true] %s24
      %27 = dma.hbm_to_vmem [thread:$0]  %s23, 128, %s25, [#allocation5]
    $region5: #{_scatter_rows.1} parent=1 // pred_fallthru
      _
    // Predicated region
    $region6: #{_scatter_rows.1} parent=1 // pred_check
      _
    $region7: #{_scatter_rows.1} parent=1 // pred_check_branch
      %29 = sbr.rel (0) target = $region9
    $region8: #{_scatter_rows.1} parent=1 // pred_region
      %31 = dma.done [#allocation5], 128
    $region9: #{_scatter_rows.1} parent=1 // pred_fallthru
      _
    %s32 = smul.u32 0, 12
    %s33 = sld [smem:[#allocation3 + %s32]]
    %p34 = scmp.ge.s32.totalorder %s33, 0
    %p35 = scmp.gt.s32.totalorder %s33, 0
    %s36 = scalar_select %p35, %s33, 0
    %s37 = scalar_lea.vmem [#allocation4], %s36
    %v38 = vld [vmem:[%s37] sm:$0x1]
    %s39 = scalar_select %p34, 1, 0
    %v40 = vstv %s39
    %vm41 = vcmp.eq.s32.totalorder %v40, 1
    %v42 = vsel %vm41, %v38, 0.0
    %vm43 = vcmask 253952
    %44 = vst.msk [vmem:[#allocation7] sm:$0x1] %vm43, %v42
    %s45 = sadd.s32 %s32, 1
    %s46 = sld [smem:[#allocation3 + %s45]]
    %p47 = scmp.ge.s32.totalorder %s46, 0
    %p48 = scmp.gt.s32.totalorder %s46, 0
    %s49 = scalar_select %p48, %s46, 0
    %s50 = scalar_lea.vmem [#allocation4], %s49
    %v51 = vld [vmem:[%s50] sm:$0x1]
    %s52 = scalar_select %p47, 1, 0
    %v53 = vstv %s52
    %vm54 = vcmp.eq.s32.totalorder %v53, 1
    %v55 = vsel %vm54, %v51, 0.0
    %56 = vst.msk [vmem:[#allocation7 + $0x1] sm:$0x1] %vm43, %v55
    %s57 = sadd.s32 %s32, 2
    %s58 = sld [smem:[#allocation3 + %s57]]
    %p59 = scmp.ge.s32.totalorder %s58, 0
    %p60 = scmp.gt.s32.totalorder %s58, 0
    %s61 = scalar_select %p60, %s58, 0
    %s62 = scalar_lea.vmem [#allocation4], %s61
    %v63 = vld [vmem:[%s62] sm:$0x1]
    %s64 = scalar_select %p59, 1, 0
    %v65 = vstv %s64
    %vm66 = vcmp.eq.s32.totalorder %v65, 1
    %v67 = vsel %vm66, %v63, 0.0
    %68 = vst.msk [vmem:[#allocation7 + $0x2] sm:$0x1] %vm43, %v67
    %s69 = sadd.s32 %s32, 3
    %s70 = sld [smem:[#allocation3 + %s69]]
    %p71 = scmp.ge.s32.totalorder %s70, 0
    %p72 = scmp.gt.s32.totalorder %s70, 0
    %s73 = scalar_select %p72, %s70, 0
    %s74 = scalar_lea.vmem [#allocation4], %s73
    %v75 = vld [vmem:[%s74] sm:$0x1]
    %s76 = scalar_select %p71, 1, 0
    %v77 = vstv %s76
    %vm78 = vcmp.eq.s32.totalorder %v77, 1
    %v79 = vsel %vm78, %v75, 0.0
    %80 = vst.msk [vmem:[#allocation7 + $0x3] sm:$0x1] %vm43, %v79
    %s81 = sadd.s32 %s32, 4
    %s82 = sld [smem:[#allocation3 + %s81]]
    %p83 = scmp.ge.s32.totalorder %s82, 0
    %p84 = scmp.gt.s32.totalorder %s82, 0
    %s85 = scalar_select %p84, %s82, 0
    %s86 = scalar_lea.vmem [#allocation4], %s85
    %v87 = vld [vmem:[%s86] sm:$0x1]
    %s88 = scalar_select %p83, 1, 0
    %v89 = vstv %s88
    %vm90 = vcmp.eq.s32.totalorder %v89, 1
    %v91 = vsel %vm90, %v87, 0.0
    %92 = vst.msk [vmem:[#allocation7 + $0x4] sm:$0x1] %vm43, %v91
    %s93 = sadd.s32 %s32, 5
    %s94 = sld [smem:[#allocation3 + %s93]]
    %p95 = scmp.ge.s32.totalorder %s94, 0
    %p96 = scmp.gt.s32.totalorder %s94, 0
    %s97 = scalar_select %p96, %s94, 0
    %s98 = scalar_lea.vmem [#allocation4], %s97
    %v99 = vld [vmem:[%s98] sm:$0x1]
    %s100 = scalar_select %p95, 1, 0
    %v101 = vstv %s100
    %vm102 = vcmp.eq.s32.totalorder %v101, 1
    %v103 = vsel %vm102, %v99, 0.0
    %104 = vst.msk [vmem:[#allocation7 + $0x5] sm:$0x1] %vm43, %v103
    %s105 = sadd.s32 %s32, 6
    %s106 = sld [smem:[#allocation3 + %s105]]
    %p107 = scmp.ge.s32.totalorder %s106, 0
    %p108 = scmp.gt.s32.totalorder %s106, 0
    %s109 = scalar_select %p108, %s106, 0
    %s110 = scalar_lea.vmem [#allocation4], %s109
    %v111 = vld [vmem:[%s110] sm:$0x1]
    %s112 = scalar_select %p107, 1, 0
    %v113 = vstv %s112
    %vm114 = vcmp.eq.s32.totalorder %v113, 1
    %v115 = vsel %vm114, %v111, 0.0
    %116 = vst.msk [vmem:[#allocation7 + $0x6] sm:$0x1] %vm43, %v115
    %s117 = sadd.s32 %s32, 7
    %s118 = sld [smem:[#allocation3 + %s117]]
    %p119 = scmp.ge.s32.totalorder %s118, 0
    %p120 = scmp.gt.s32.totalorder %s118, 0
    %s121 = scalar_select %p120, %s118, 0
    %s122 = scalar_lea.vmem [#allocation4], %s121
    %v123 = vld [vmem:[%s122] sm:$0x1]
    %s124 = scalar_select %p119, 1, 0
    %v125 = vstv %s124
    %vm126 = vcmp.eq.s32.totalorder %v125, 1
    %v127 = vsel %vm126, %v123, 0.0
    %128 = vst.msk [vmem:[#allocation7 + $0x7] sm:$0x1] %vm43, %v127
    %s129 = sadd.s32 %s32, 8
    %s130 = sld [smem:[#allocation3 + %s129]]
    %p131 = scmp.ge.s32.totalorder %s130, 0
    %p132 = scmp.gt.s32.totalorder %s130, 0
    %s133 = scalar_select %p132, %s130, 0
    %s134 = scalar_lea.vmem [#allocation4], %s133
    %v135 = vld [vmem:[%s134] sm:$0x1]
    %s136 = scalar_select %p131, 1, 0
    %v137 = vstv %s136
    %vm138 = vcmp.eq.s32.totalorder %v137, 1
    %v139 = vsel %vm138, %v135, 0.0
    %140 = vst.msk [vmem:[#allocation7 + $0x8] sm:$0x1] %vm43, %v139
    %s141 = sadd.s32 %s32, 9
    %s142 = sld [smem:[#allocation3 + %s141]]
    %p143 = scmp.ge.s32.totalorder %s142, 0
    %p144 = scmp.gt.s32.totalorder %s142, 0
    %s145 = scalar_select %p144, %s142, 0
    %s146 = scalar_lea.vmem [#allocation4], %s145
    %v147 = vld [vmem:[%s146] sm:$0x1]
    %s148 = scalar_select %p143, 1, 0
    %v149 = vstv %s148
    %vm150 = vcmp.eq.s32.totalorder %v149, 1
    %v151 = vsel %vm150, %v147, 0.0
    %152 = vst.msk [vmem:[#allocation7 + $0x9] sm:$0x1] %vm43, %v151
    %s153 = sadd.s32 %s32, 10
    %s154 = sld [smem:[#allocation3 + %s153]]
    %p155 = scmp.ge.s32.totalorder %s154, 0
    %p156 = scmp.gt.s32.totalorder %s154, 0
    %s157 = scalar_select %p156, %s154, 0
    %s158 = scalar_lea.vmem [#allocation4], %s157
    %v159 = vld [vmem:[%s158] sm:$0x1]
    %s160 = scalar_select %p155, 1, 0
    %v161 = vstv %s160
    %vm162 = vcmp.eq.s32.totalorder %v161, 1
    %v163 = vsel %vm162, %v159, 0.0
    %164 = vst.msk [vmem:[#allocation7 + $0xa] sm:$0x1] %vm43, %v163
    %s165 = sadd.s32 %s32, 11
    %s166 = sld [smem:[#allocation3 + %s165]]
    %p167 = scmp.ge.s32.totalorder %s166, 0
    %p168 = scmp.gt.s32.totalorder %s166, 0
    %s169 = scalar_select %p168, %s166, 0
    %s170 = scalar_lea.vmem [#allocation4], %s169
    %v171 = vld [vmem:[%s170] sm:$0x1]
    %s172 = scalar_select %p167, 1, 0
    %v173 = vstv %s172
    %vm174 = vcmp.eq.s32.totalorder %v173, 1
    %v175 = vsel %vm174, %v171, 0.0
    %176 = vst.msk [vmem:[#allocation7 + $0xb] sm:$0x1] %vm43, %v175
    // Predicated region
    $region10: #{_scatter_rows.1} parent=1 // pred_check
      _
    $region11: #{_scatter_rows.1} parent=1 // pred_check_branch
      %178 = sbr.rel (0) target = $region13
    $region12: #{_scatter_rows.1} parent=1 // pred_region
      %180 = vsyncadd [#allocation6], 0
      %s181 = sshll.u32 [#allocation7], 4
      %s182 = int_to_ptr.vmem [resolvable:$true] %s181
      %s183 = sshll.u32 %s2, 4
      %s184 = int_to_ptr.hbm [resolvable:$true] %s183
      %189 = dma.vmem_to_hbm [thread:$0]  %s182, 256, %s184, [#allocation6], 128, 128, 8
    $region13: #{_scatter_rows.1} parent=1 // pred_fallthru
      _
    // Predicated region
    $region14: #{_scatter_rows.1} parent=1 // pred_check
      _
    $region15: #{_scatter_rows.1} parent=1 // pred_check_branch
      %191 = sbr.rel (0) target = $region17
    $region16: #{_scatter_rows.1} parent=1 // pred_region
      %193 = dma.done [#allocation6], 256
    $region17: #{_scatter_rows.1} parent=1 // pred_fallthru
      _
    %194 = vsyncpa [#allocation5], 1
    %195 = vsyncpa [#allocation6], 1

</llo_original>
